<compile_context>
chip_gen: v6e
topology: v6e:2x2x1
jax: 0.10.0
libtpu: 0.0.40
codegen_flags: <defaults>
</compile_context>

<pallas_src>
import jax
import jax.numpy as jnp
from jax.experimental import pallas as pl
from jax.experimental.pallas import tpu as pltpu

_LANE = 128  # lane width; the output is padded to a lane-dense slab


def _mlp_kernel(x_ref, w1_ref, b1_ref, w2_ref, b2_ref, out_ref):
    # linear1 on the MXU: [TB, D] @ [D, H] + [1, H], f32 accumulation.
    h = jnp.dot(x_ref[...], w1_ref[...], preferred_element_type=jnp.float32)
    h = jnp.maximum(h + b1_ref[...], 0.0)  # ReLU (VPU)

    # linear2 (output width 1): VPU multiply + XLU lane reduce instead of an
    # MXU matmul that would waste 127/255 of the systolic-array columns.
    o = jnp.sum(h * w2_ref[...], axis=-1, keepdims=True) + b2_ref[0, 0]

    # sigmoid: exp on the EUP, reciprocal on the EUP (approx) -> VPU slot free.
    y = pl.reciprocal(1.0 + jnp.exp(-o), approx=True)

    # Lane-dense store: broadcast the single result column across all 128
    # lanes so the store is an unmasked vst; the wrapper slices column 0.
    out_ref[...] = jnp.broadcast_to(y, out_ref.shape).astype(out_ref.dtype)


def _round_up(x, m):
    return (x + m - 1) // m * m


def neural_net1_forward(x, w1, b1, w2, b2, *, block_b=512):
    """x: [B, D]; w1: [D, H]; b1: [H]; w2: [H, 1]; b2: [1] -> y_pred: [B, 1]."""
    B, D = x.shape
    H = w1.shape[1]

    # Batch tile: large enough to amortize the ~0.35 us per-grid-step overhead
    # when B grows, padded to a multiple of 8 (sublane) so tiling is legal.
    tb = min(block_b, _round_up(B, 8))
    bp = _round_up(B, tb)
    if bp != B:
        x = jnp.pad(x, ((0, bp - B), (0, 0)))

    b1_row = b1.reshape(1, H)
    w2_row = w2.reshape(1, H)   # second linear's weights as a broadcastable row
    b2_sc = b2.reshape(1, 1)    # scalar bias -> SMEM

    out_padded = pl.pallas_call(
        _mlp_kernel,
        out_shape=jax.ShapeDtypeStruct((bp, _LANE), jnp.float32),
        grid=(bp // tb,),
        in_specs=[
            pl.BlockSpec((tb, D), lambda i: (i, 0)),           # x: tiled over batch
            pl.BlockSpec((D, H), lambda i: (0, 0)),            # w1: resident
            pl.BlockSpec((1, H), lambda i: (0, 0)),            # b1: resident
            pl.BlockSpec((1, H), lambda i: (0, 0)),            # w2 row: resident
            pl.BlockSpec(memory_space=pltpu.MemorySpace.SMEM), # b2: SMEM scalar
        ],
        out_specs=pl.BlockSpec((tb, _LANE), lambda i: (i, 0)),
        compiler_params=pltpu.CompilerParams(
            dimension_semantics=("parallel",),  # lets v7x shard across both TCs
        ),
    )(x, w1, b1_row, w2_row, b2_sc)

    return out_padded[:B, :1]


if __name__ == "__main__":
    # Small shapes consistent with the module's forward.
    batch, input_size, hidden_size = 8, 32, 32

    key = jax.random.PRNGKey(0)
    kx, kw1, kb1, kw2, kb2 = jax.random.split(key, 5)

    x = jax.random.normal(kx, (batch, input_size), dtype=jnp.float32)
    # nn.Linear(input_size, hidden_size).weight is [H, D]; we keep [D, H] so
    # the kernel does plain x @ W (+ b) on the MXU.
    w1 = jax.random.normal(kw1, (input_size, hidden_size), dtype=jnp.float32) * 0.1
    b1 = jax.random.normal(kb1, (hidden_size,), dtype=jnp.float32) * 0.1
    w2 = jax.random.normal(kw2, (hidden_size, 1), dtype=jnp.float32) * 0.1
    b2 = jax.random.normal(kb2, (1,), dtype=jnp.float32) * 0.1

    y_pred = neural_net1_forward(x, w1, b1, w2, b2)
    jax.block_until_ready(y_pred)

    # Pure-JAX reference check.
    ref = jax.nn.sigmoid(jnp.maximum(x @ w1 + b1, 0.0) @ w2 + b2)
    assert y_pred.shape == (batch, 1)
    # Slightly looser tolerance because the sigmoid uses the EUP approximate
    # reciprocal (pl.reciprocal(..., approx=True)); outputs are in (0, 1).
    assert jnp.allclose(y_pred, ref, atol=1e-3, rtol=1e-3), (
        float(jnp.max(jnp.abs(y_pred - ref))))

    print("KERNEL_OK")
</pallas_src>

<mosaic_0001>
module attributes {stable_mosaic.version = 11 : i64} {
  func.func @_mlp_kernel(%arg0: i32, %arg1: memref<8x32xf32, #tpu.memory_space<vmem>>, %arg2: memref<32x32xf32, #tpu.memory_space<vmem>>, %arg3: memref<1x32xf32, #tpu.memory_space<vmem>>, %arg4: memref<1x32xf32, #tpu.memory_space<vmem>>, %arg5: memref<1x1xf32, #tpu.memory_space<smem>>, %arg6: memref<8x128xf32, #tpu.memory_space<vmem>>) attributes {dimension_semantics = [#tpu.dimension_semantics<parallel>], iteration_bounds = array<i64: 1>, scalar_prefetch = 0 : i64, scratch_operands = 0 : i64, tpu.core_type = #tpu.core_type<tc>, window_params = [{transform_indices = @transform_0, window_bounds = array<i64: 8, 32>}, {pipeline_mode = #tpu.pipeline_mode<synchronous>, transform_indices = @transform_1, window_bounds = array<i64: 32, 32>}, {pipeline_mode = #tpu.pipeline_mode<synchronous>, transform_indices = @transform_2, window_bounds = array<i64: 1, 32>}, {pipeline_mode = #tpu.pipeline_mode<synchronous>, transform_indices = @transform_3, window_bounds = array<i64: 1, 32>}, {transform_indices = @transform_4, window_bounds = array<i64: 1, 1>}, {transform_indices = @transform_5, window_bounds = array<i64: 8, 128>}]} {
    %c0 = arith.constant 0 : index
    %c0_0 = arith.constant 0 : index
    %0 = vector.load %arg1[%c0, %c0_0] : memref<8x32xf32, #tpu.memory_space<vmem>>, vector<8x32xf32>
    %c0_1 = arith.constant 0 : index
    %c0_2 = arith.constant 0 : index
    %1 = vector.load %arg2[%c0_1, %c0_2] : memref<32x32xf32, #tpu.memory_space<vmem>>, vector<32x32xf32>
    %cst = arith.constant dense<0.000000e+00> : vector<8x32xf32>
    %2 = tpu.matmul %0, %1, %cst {dimension_numbers = #tpu.dot_dimension_numbers<[1], [0], [0], [1], [0, 0, 1, 1], [], []>} : vector<8x32xf32>, vector<32x32xf32>, vector<8x32xf32> -> vector<8x32xf32>
    %c0_3 = arith.constant 0 : index
    %c0_4 = arith.constant 0 : index
    %3 = vector.load %arg3[%c0_3, %c0_4] : memref<1x32xf32, #tpu.memory_space<vmem>>, vector<1x32xf32>
    %4 = vector.broadcast %3 : vector<1x32xf32> to vector<8x32xf32>
    %5 = arith.addf %2, %4 : vector<8x32xf32>
    %cst_5 = arith.constant 0.000000e+00 : f32
    %6 = vector.broadcast %cst_5 : f32 to vector<8x32xf32>
    %7 = arith.maximumf %5, %6 : vector<8x32xf32>
    %c0_6 = arith.constant 0 : index
    %c0_7 = arith.constant 0 : index
    %8 = vector.load %arg4[%c0_6, %c0_7] : memref<1x32xf32, #tpu.memory_space<vmem>>, vector<1x32xf32>
    %9 = vector.broadcast %8 : vector<1x32xf32> to vector<8x32xf32>
    %10 = arith.mulf %7, %9 : vector<8x32xf32>
    %cst_8 = arith.constant dense<0.000000e+00> : vector<8xf32>
    %11 = vector.multi_reduction <add>, %10, %cst_8 [1] : vector<8x32xf32> to vector<8xf32>
    %12 = vector.shape_cast %11 : vector<8xf32> to vector<8x1xf32>
    %c0_9 = arith.constant 0 : index
    %c0_10 = arith.constant 0 : index
    %13 = memref.load %arg5[%c0_9, %c0_10] : memref<1x1xf32, #tpu.memory_space<smem>>
    %14 = vector.broadcast %13 : f32 to vector<8x1xf32>
    %15 = arith.addf %12, %14 : vector<8x1xf32>
    %cst_11 = arith.constant 0.000000e+00 : f32
    %16 = vector.broadcast %cst_11 : f32 to vector<8x1xf32>
    %17 = arith.subf %16, %15 : vector<8x1xf32>
    %18 = math.exp %17 : vector<8x1xf32>
    %cst_12 = arith.constant 1.000000e+00 : f32
    %19 = vector.broadcast %cst_12 : f32 to vector<8x1xf32>
    %20 = arith.addf %19, %18 : vector<8x1xf32>
    %21 = tpu.reciprocal %20 {approx = true} : vector<8x1xf32> -> vector<8x1xf32>
    %22 = vector.shape_cast %21 : vector<8x1xf32> to vector<8x1xf32>
    %23 = vector.broadcast %22 : vector<8x1xf32> to vector<8x128xf32>
    %c0_13 = arith.constant 0 : index
    %c0_14 = arith.constant 0 : index
    %24 = vector.load %arg6[%c0_13, %c0_14] : memref<8x128xf32, #tpu.memory_space<vmem>>, vector<8x128xf32>
    tpu.vector_store %arg6[%c0_13, %c0_14], %23 {strides = array<i32>} : memref<8x128xf32, #tpu.memory_space<vmem>>, vector<8x128xf32>,
    return
  }
  func.func @transform_0(%arg0: i32) -> (i32, i32) {
    %c0_i32 = arith.constant 0 : i32
    %c0_i32_0 = arith.constant 0 : i32
    return %arg0, %c0_i32 : i32, i32
  }
  func.func @transform_1(%arg0: i32) -> (i32, i32) {
    %c0_i32 = arith.constant 0 : i32
    %c0_i32_0 = arith.constant 0 : i32
    %c0_i32_1 = arith.constant 0 : i32
    return %c0_i32, %c0_i32_0 : i32, i32
  }
  func.func @transform_2(%arg0: i32) -> (i32, i32) {
    %c0_i32 = arith.constant 0 : i32
    %c0_i32_0 = arith.constant 0 : i32
    %c0_i32_1 = arith.constant 0 : i32
    return %c0_i32, %c0_i32_0 : i32, i32
  }
  func.func @transform_3(%arg0: i32) -> (i32, i32) {
    %c0_i32 = arith.constant 0 : i32
    %c0_i32_0 = arith.constant 0 : i32
    %c0_i32_1 = arith.constant 0 : i32
    return %c0_i32, %c0_i32_0 : i32, i32
  }
  func.func @transform_4(%arg0: i32) -> (i32, i32) {
    %c0_i32 = arith.constant 0 : i32
    %c0_i32_0 = arith.constant 0 : i32
    %c0_i32_1 = arith.constant 0 : i32
    return %c0_i32, %c0_i32_0 : i32, i32
  }
  func.func @transform_5(%arg0: i32) -> (i32, i32) {
    %c0_i32 = arith.constant 0 : i32
    %c0_i32_0 = arith.constant 0 : i32
    return %arg0, %c0_i32 : i32, i32
  }
}

</mosaic_0001>

<llo_original>
// kernel: tpu_custom_call.1
$region0: #{tpu_custom_call.1}
  #allocation0 [shape = 'u32[]', space=smem, size = 0x4, offset = 0x4, fixed_abs, tag = 'smem constant byte address 0x4 - core index']
  #allocation1 [shape = 'u32[144,128]{1,0:T(1,128)}', space=vmem, size = 0x12000, scoped, tag = 'internal scratch']
  #allocation2 [shape = 'f32[1,1]{1,0:T(1,128)S(6)}', space=smem, size = 0x200, scoped, tag = 'scoped memory for tpu_custom_call.1']
  %s0 = inlined_call_operand.hbm [shape: f32[8,32], index: 0, kind: input, shape index: {}]
  %s1 = inlined_call_operand.hbm [shape: f32[32,32], index: 1, kind: input, shape index: {}]
  %s2 = inlined_call_operand.vmem [shape: f32[1,32], index: 2, kind: input, shape index: {}]
  %s3 = inlined_call_operand.vmem [shape: f32[1,32], index: 3, kind: input, shape index: {}]
  %s4 = inlined_call_operand.<no memory space> [shape: f32[1,1], index: 4, kind: input, shape index: {}]
  %s5 = inlined_call_operand.hbm [shape: f32[8,128], index: 5, kind: output, shape index: {}]
  %s6 = sld [smem:[#allocation0]]
  $region38: #{tpu_custom_call.1} parent=0
    _
  %s8 = ssub.s32 1, %s6
  %s9 = scalar_select 0, %s8, %s6
  %10 = sst [smem:[#allocation2]] %s4
  $region1: #{tpu_custom_call.1} parent=0
    #allocation3 [shape = 'u8[4096]{0}', space=vmem, size = 0x1000, scoped, tag = 'input window, operand 0, single buffered']
    #allocation4 [shape = 's32[1]{0}', space=sflag, size = 0x4, scoped, tag = 'scoped memory for tpu_custom_call.1']
    #allocation5 [shape = 's32[1]{0}', space=sflag, size = 0x4, scoped, tag = 'scoped memory for tpu_custom_call.1']
    #allocation6 [shape = 'u8[16384]{0}', space=vmem, size = 0x4000, scoped, tag = 'input window, operand 1, single buffered']
    #allocation7 [shape = 's32[1]{0}', space=sflag, size = 0x4, scoped, tag = 'scoped memory for tpu_custom_call.1']
    #allocation8 [shape = 'u8[4096]{0}', space=vmem, size = 0x1000, scoped, tag = 'output window, operand 0, single buffered']
    %11 = vsyncpa [#allocation4], 0
    %12 = vsyncpa [#allocation7], 0
    %13 = vsyncpa [#allocation5], 0
    // Predicated region
    $region2: #{tpu_custom_call.1} parent=1 // pred_check
      _
    $region3: #{tpu_custom_call.1} parent=1 // pred_check_branch
      %15 = sbr.rel (0) target = $region5
    $region4: #{tpu_custom_call.1} parent=1 // pred_region
      %s17 = ssub.s32 128, 128
      %18 = vsyncadd [#allocation4], %s17
      %s20 = sshll.u32 [#allocation3], 4
      %s21 = int_to_ptr.vmem [resolvable:$true] %s20
      %23 = dma.hbm_to_vmem [thread:$0]  %s0, 128, %s21, [#allocation4]
    $region5: #{tpu_custom_call.1} parent=1 // pred_fallthru
      _
    // Predicated region
    $region6: #{tpu_custom_call.1} parent=1 // pred_check
      _
    $region7: #{tpu_custom_call.1} parent=1 // pred_check_branch
      %25 = sbr.rel (0) target = $region9
    $region8: #{tpu_custom_call.1} parent=1 // pred_region
      %s27 = ssub.s32 512, 512
      %28 = vsyncadd [#allocation7], %s27
      %s29 = sshll.u32 [#allocation6], 4
      %s30 = int_to_ptr.vmem [resolvable:$true] %s29
      %35 = dma.hbm_to_vmem [thread:$0]  %s1, 512, %s30, [#allocation7], 128, 128, 8
    $region9: #{tpu_custom_call.1} parent=1 // pred_fallthru
      _
    // Predicated region
    $region10: #{tpu_custom_call.1} parent=1 // pred_check
      _
    $region11: #{tpu_custom_call.1} parent=1 // pred_check_branch
      %37 = sbr.rel (0) target = $region13
    $region12: #{tpu_custom_call.1} parent=1 // pred_region
      _
    $region13: #{tpu_custom_call.1} parent=1 // pred_fallthru
      _
    // Predicated region
    $region14: #{tpu_custom_call.1} parent=1 // pred_check
      _
    $region15: #{tpu_custom_call.1} parent=1 // pred_check_branch
      %39 = sbr.rel (0) target = $region17
    $region16: #{tpu_custom_call.1} parent=1 // pred_region
      _
    $region17: #{tpu_custom_call.1} parent=1 // pred_fallthru
      _
    // Predicated region
    $region18: #{tpu_custom_call.1} parent=1 // pred_check
      _
    $region19: #{tpu_custom_call.1} parent=1 // pred_check_branch
      %41 = sbr.rel (0) target = $region21
    $region20: #{tpu_custom_call.1} parent=1 // pred_region
      _
    $region21: #{tpu_custom_call.1} parent=1 // pred_fallthru
      _
    // Predicated region
    $region22: #{tpu_custom_call.1} parent=1 // pred_check
      _
    $region23: #{tpu_custom_call.1} parent=1 // pred_check_branch
      %43 = sbr.rel (0) target = $region25
    $region24: #{tpu_custom_call.1} parent=1 // pred_region
      %44 = dma.done [#allocation4], 128
    $region25: #{tpu_custom_call.1} parent=1 // pred_fallthru
      _
    // Predicated region
    $region26: #{tpu_custom_call.1} parent=1 // pred_check
      _
    $region27: #{tpu_custom_call.1} parent=1 // pred_check_branch
      %46 = sbr.rel (0) target = $region29
    $region28: #{tpu_custom_call.1} parent=1 // pred_region
      %47 = dma.done [#allocation7], 512
    $region29: #{tpu_custom_call.1} parent=1 // pred_fallthru
      _
    %v48 = vld [vmem:[#allocation3] sm:$0xff]
    %v49 = vld [vmem:[#allocation6] sm:$0xff]
    %v50 = vld [vmem:[#allocation6 + $0x8] sm:$0xff]
    %v51 = vld [vmem:[#allocation6 + $0x10] sm:$0xff]
    %v52 = vld [vmem:[#allocation6 + $0x18] sm:$0xff]
    %v53 = vld [vmem:[%s2] sm:$0x1]
    %v55 = vlaneseq
    %v56 = vshrl.u32 %v55, 7
    %v57 = vsub.s32 0, %v56
    %v58 = vrot.slane %v53, %v57
    %vm60 = vcmask 261120
    %v62 = vsel %vm60, %v48, 0
    %64 = vmatprep.subr.mxu0 0.0
    %65 = vmatpush1.msra.mxu0 0.0
    %66 = vmatprep.subr.mxu0 0.0
    %67 = vmatpush1.msra.mxu0 0.0
    %68 = vmatprep.subr.mxu0 0.0
    %69 = vmatpush1.msra.mxu0 0.0
    %70 = vmatprep.subr.mxu0 0.0
    %71 = vmatpush1.msra.mxu0 0.0
    %72 = vmatprep.subr.mxu0 0.0
    %73 = vmatpush1.msra.mxu0 0.0
    %74 = vmatprep.subr.mxu0 0.0
    %75 = vmatpush1.msra.mxu0 0.0
    %76 = vmatprep.subr.mxu0 0.0
    %77 = vmatpush1.msra.mxu0 0.0
    %78 = vmatprep.subr.mxu0 0.0
    %79 = vmatpush1.msra.mxu0 0.0
    %80 = vmatprep.subr.mxu0 0.0
    %81 = vmatpush1.msra.mxu0 0.0
    %82 = vmatprep.subr.mxu0 0.0
    %83 = vmatpush1.msra.mxu0 0.0
    %84 = vmatprep.subr.mxu0 0.0
    %85 = vmatpush1.msra.mxu0 0.0
    %86 = vmatprep.subr.mxu0 0.0
    %87 = vmatpush1.msra.mxu0 0.0
    %88 = vmatprep.subr.mxu0 0.0
    %89 = vmatpush1.msra.mxu0 %v52
    %90 = vmatprep.subr.mxu0 0.0
    %91 = vmatpush1.msra.mxu0 %v51
    %92 = vmatprep.subr.mxu0 0.0
    %93 = vmatpush1.msra.mxu0 %v50
    %94 = vmatprep.subr.mxu0 0.0
    %95 = vmatpush1.msra.mxu0 %v49
    %96 = vmatprep.subr.mxu0 0.0
    %97 = vmatpush2.msra.mxu0 0.0
    %98 = vmatprep.subr.mxu0 0.0
    %99 = vmatpush2.msra.mxu0 0.0
    %100 = vmatprep.subr.mxu0 0.0
    %101 = vmatpush2.msra.mxu0 0.0
    %102 = vmatprep.subr.mxu0 0.0
    %103 = vmatpush2.msra.mxu0 0.0
    %104 = vmatprep.subr.mxu0 0.0
    %105 = vmatpush2.msra.mxu0 0.0
    %106 = vmatprep.subr.mxu0 0.0
    %107 = vmatpush2.msra.mxu0 0.0
    %108 = vmatprep.subr.mxu0 0.0
    %109 = vmatpush2.msra.mxu0 0.0
    %110 = vmatprep.subr.mxu0 0.0
    %111 = vmatpush2.msra.mxu0 0.0
    %112 = vmatprep.subr.mxu0 0.0
    %113 = vmatpush2.msra.mxu0 0.0
    %114 = vmatprep.subr.mxu0 0.0
    %115 = vmatpush2.msra.mxu0 0.0
    %116 = vmatprep.subr.mxu0 0.0
    %117 = vmatpush2.msra.mxu0 0.0
    %118 = vmatprep.subr.mxu0 0.0
    %119 = vmatpush2.msra.mxu0 0.0
    %120 = vmatprep.subr.mxu0 0.0
    %121 = vmatpush2.msra.mxu0 0.0
    %122 = vmatprep.subr.mxu0 0.0
    %123 = vmatpush2.msra.mxu0 0.0
    %124 = vmatprep.subr.mxu0 0.0
    %125 = vmatpush2.msra.mxu0 0.0
    %126 = vmatprep.subr.mxu0 0.0
    %127 = vmatpush2.msra.mxu0 0.0
    %128 = vmatprep.mubr.f32.mxu0 0.0
    %129 = vmatmul.mubr.f32.gmra.mxu0 %v62
    %v130 = vpop.f32.mrf.mxu0
    %v131 = vadd.f32 %v58, %v130
    %v132 = vpop.f32.mrf.mxu0
    %133 = vdwg.mxu0
    %v134 = vmax.f32 %v131, 0.0
    %v135 = vld [vmem:[%s3] sm:$0x1]
    %v137 = vlaneseq
    %v138 = vshrl.u32 %v137, 7
    %v139 = vsub.s32 0, %v138
    %v140 = vrot.slane %v135, %v139
    %v142 = vmul.f32 %v134, %v140
    %v143 = vsel %vm60, %v142, 0.0
    %144 = vadd.xlane.f32.xlu0 %v143
    %v145 = vpop.xlane.xlu0 %144
    %s146 = sld [smem:[#allocation2]]
    %v147 = vstv %s146
    %v148 = vadd.f32 %v145, %v147
    %v149 = vsub.f32 0.0, %v148
    %v150 = vmul.f32 %v149, 1.442695
    %v151 = vpow.pop %v150
    %v152 = vadd.f32 %v151, 1.0
    %v153 = vrcp.pop %v152
    %154 = vst [vmem:[#allocation8] sm:$0xff] %v153
    // Predicated region
    $region30: #{tpu_custom_call.1} parent=1 // pred_check
      _
    $region31: #{tpu_custom_call.1} parent=1 // pred_check_branch
      %156 = sbr.rel (0) target = $region33
    $region32: #{tpu_custom_call.1} parent=1 // pred_region
      %s158 = ssub.s32 128, 128
      %159 = vsyncadd [#allocation5], %s158
      %s161 = sshll.u32 [#allocation8], 4
      %s162 = int_to_ptr.vmem [resolvable:$true] %s161
      %164 = dma.vmem_to_hbm [thread:$0]  %s162, 128, %s5, [#allocation5]
    $region33: #{tpu_custom_call.1} parent=1 // pred_fallthru
      _
    // Predicated region
    $region34: #{tpu_custom_call.1} parent=1 // pred_check
      _
    $region35: #{tpu_custom_call.1} parent=1 // pred_check_branch
      %166 = sbr.rel (0) target = $region37
    $region36: #{tpu_custom_call.1} parent=1 // pred_region
      %167 = dma.done [#allocation5], 128
    $region37: #{tpu_custom_call.1} parent=1 // pred_fallthru
      _
    %168 = vsyncpa [#allocation4], 1
    %169 = vsyncpa [#allocation7], 1
    %170 = vsyncpa [#allocation5], 1

</llo_original>
